<compile_context>
chip_gen: v7x
topology: tpu7x:2x2x1
jax: 0.10.0
libtpu: 0.0.40
codegen_flags: <defaults>
</compile_context>

<pallas_src>
import jax
import jax.numpy as jnp
from jax.experimental import pallas as pl
from jax.experimental.pallas import tpu as pltpu

LRELU_SLOPE = 0.01   # PyTorch nn.LeakyReLU() default negative_slope

IN_DIM = 64
HID = 256
OUT_DIM = 28 * 28    # 784


def _round_up(n, m):
    return -(-n // m) * m


def _leaky_relu(x):
    # slope < 1  =>  leaky_relu(x) == max(x, slope * x)  (single VALU op)
    return jnp.maximum(x, LRELU_SLOPE * x)


def generator_kernel(x_ref, w1_ref, b1_ref, w2_ref, b2_ref, w3_ref, b3_ref, o_ref):
    # fc1 + LeakyReLU  (bf16 operands on MXU, f32 accumulate & activations)
    h = jnp.dot(x_ref[...], w1_ref[...], preferred_element_type=jnp.float32)
    h = _leaky_relu(h + b1_ref[...])
    # fc2 + LeakyReLU
    h = jnp.dot(h.astype(jnp.bfloat16), w2_ref[...],
                preferred_element_type=jnp.float32)
    h = _leaky_relu(h + b2_ref[...])
    # out + Tanh (tanh in f32, cast only at the store -> bf16 output traffic)
    h = jnp.dot(h.astype(jnp.bfloat16), w3_ref[...],
                preferred_element_type=jnp.float32)
    o_ref[...] = jnp.tanh(h + b3_ref[...]).astype(o_ref.dtype)


def prepare_params(params):
    """One-time parameter prep (hoisted out of the hot forward path):
    bf16 weights (stored (in, out)), f32 biases as (1, out) rows."""
    return {
        "w1": params["w1"].astype(jnp.bfloat16),
        "b1": params["b1"].reshape(1, HID).astype(jnp.float32),
        "w2": params["w2"].astype(jnp.bfloat16),
        "b2": params["b2"].reshape(1, HID).astype(jnp.float32),
        "w3": params["w3"].astype(jnp.bfloat16),
        "b3": params["b3"].reshape(1, OUT_DIM).astype(jnp.float32),
    }


def generator_forward(x, prep, tb=None):
    """x: (B, 64) float32 latent. prep: output of prepare_params()."""
    B = x.shape[0]
    if tb is None:
        # >=2 grid steps whenever B >= 16 (v7x megacore), cap at 512 rows/tile.
        tb = 8 if B <= 8 else min(512, _round_up(pl.cdiv(B, 2), 8))
    tb = max(8, _round_up(tb, 8))
    Bp = _round_up(B, tb)
    grid = (Bp // tb,)

    # Cast x once to bf16 (tiny); pad the batch only if B isn't a tile multiple.
    xb = x.astype(jnp.bfloat16)
    if Bp != B:
        xb = jnp.zeros((Bp, IN_DIM), jnp.bfloat16).at[:B].set(xb)

    const = lambda shape: pl.BlockSpec(shape, lambda i: (0, 0))

    out = pl.pallas_call(
        generator_kernel,
        out_shape=jax.ShapeDtypeStruct((Bp, OUT_DIM), jnp.bfloat16),
        grid=grid,
        in_specs=[
            pl.BlockSpec((tb, IN_DIM), lambda i: (i, 0)),   # x: tiled over batch
            const((IN_DIM, HID)), const((1, HID)),          # fc1 (VMEM-resident)
            const((HID, HID)), const((1, HID)),             # fc2
            const((HID, OUT_DIM)), const((1, OUT_DIM)),     # out
        ],
        out_specs=pl.BlockSpec((tb, OUT_DIM), lambda i: (i, 0)),
        compiler_params=pltpu.CompilerParams(
            dimension_semantics=("parallel",),               # megacore over batch tiles
            vmem_limit_bytes=24 << 20,
        ),
    )(xb, prep["w1"], prep["b1"], prep["w2"], prep["b2"], prep["w3"], prep["b3"])

    # No column slice needed (output is exactly 784 wide); batch slice only on pad.
    return out if Bp == B else out[:B]


def init_params(key):
    """Deterministic init mirroring PyTorch Linear shapes (weights stored (in, out))."""
    ks = jax.random.split(key, 6)

    def lin(kw, kb, fan_in, fan_out):
        bound = 1.0 / jnp.sqrt(fan_in)
        w = jax.random.uniform(kw, (fan_in, fan_out), jnp.float32, -bound, bound)
        b = jax.random.uniform(kb, (fan_out,), jnp.float32, -bound, bound)
        return w, b

    w1, b1 = lin(ks[0], ks[1], IN_DIM, HID)
    w2, b2 = lin(ks[2], ks[3], HID, HID)
    w3, b3 = lin(ks[4], ks[5], HID, OUT_DIM)
    return {"w1": w1, "b1": b1, "w2": w2, "b2": b2, "w3": w3, "b3": b3}


def generator_ref(x, p):
    """Pure-JAX reference mirroring the kernel's bf16-input numerics (f32 output)."""
    def dot_bf16(a, w):
        return jnp.dot(a.astype(jnp.bfloat16).astype(jnp.float32),
                       w.astype(jnp.bfloat16).astype(jnp.float32),
                       preferred_element_type=jnp.float32)

    h = dot_bf16(x, p["w1"]) + p["b1"].reshape(1, -1)
    h = jnp.maximum(h, LRELU_SLOPE * h)
    h = dot_bf16(h, p["w2"]) + p["b2"].reshape(1, -1)
    h = jnp.maximum(h, LRELU_SLOPE * h)
    h = dot_bf16(h, p["w3"]) + p["b3"].reshape(1, -1)
    return jnp.tanh(h)


if __name__ == "__main__":
    key = jax.random.PRNGKey(0)
    kp, kx = jax.random.split(key)
    params = init_params(kp)
    prep = jax.block_until_ready(prepare_params(params))   # one-time weight prep

    B = 8  # small smoke-test batch; latent dim fixed at 64 by the module
    x = jax.random.normal(kx, (B, IN_DIM), jnp.float32)

    out = generator_forward(x, prep)
    out = jax.block_until_ready(out)

    ref = generator_ref(x, params)
    assert out.shape == (B, OUT_DIM), out.shape
    assert out.dtype == jnp.bfloat16, out.dtype
    out_f32 = out.astype(jnp.float32)
    err = float(jnp.max(jnp.abs(out_f32 - ref)))
    # bf16 weights + bf16 output storage => ~1e-2 absolute tolerance vs f32 PyTorch.
    assert jnp.allclose(out_f32, ref, atol=1e-2, rtol=1e-2), err

    print("KERNEL_OK")
</pallas_src>

<mosaic_0001>
module attributes {stable_mosaic.version = 11 : i64} {
  func.func @generator_kernel(%arg0: i32, %arg1: memref<8x64xbf16, #tpu.memory_space<vmem>>, %arg2: memref<64x256xbf16, #tpu.memory_space<vmem>>, %arg3: memref<1x256xf32, #tpu.memory_space<vmem>>, %arg4: memref<256x256xbf16, #tpu.memory_space<vmem>>, %arg5: memref<1x256xf32, #tpu.memory_space<vmem>>, %arg6: memref<256x784xbf16, #tpu.memory_space<vmem>>, %arg7: memref<1x784xf32, #tpu.memory_space<vmem>>, %arg8: memref<8x784xbf16, #tpu.memory_space<vmem>>) attributes {dimension_semantics = [#tpu.dimension_semantics<parallel>], iteration_bounds = array<i64: 1>, scalar_prefetch = 0 : i64, scratch_operands = 0 : i64, tpu.core_type = #tpu.core_type<tc>, window_params = [{transform_indices = @transform_0, window_bounds = array<i64: 8, 64>}, {pipeline_mode = #tpu.pipeline_mode<synchronous>, transform_indices = @transform_1, window_bounds = array<i64: 64, 256>}, {pipeline_mode = #tpu.pipeline_mode<synchronous>, transform_indices = @transform_2, window_bounds = array<i64: 1, 256>}, {pipeline_mode = #tpu.pipeline_mode<synchronous>, transform_indices = @transform_3, window_bounds = array<i64: 256, 256>}, {pipeline_mode = #tpu.pipeline_mode<synchronous>, transform_indices = @transform_4, window_bounds = array<i64: 1, 256>}, {pipeline_mode = #tpu.pipeline_mode<synchronous>, transform_indices = @transform_5, window_bounds = array<i64: 256, 784>}, {pipeline_mode = #tpu.pipeline_mode<synchronous>, transform_indices = @transform_6, window_bounds = array<i64: 1, 784>}, {transform_indices = @transform_7, window_bounds = array<i64: 8, 784>}]} {
    %c0 = arith.constant 0 : index
    %c0_0 = arith.constant 0 : index
    %0 = vector.load %arg1[%c0, %c0_0] : memref<8x64xbf16, #tpu.memory_space<vmem>>, vector<8x64xbf16>
    %c0_1 = arith.constant 0 : index
    %c0_2 = arith.constant 0 : index
    %1 = vector.load %arg2[%c0_1, %c0_2] : memref<64x256xbf16, #tpu.memory_space<vmem>>, vector<64x256xbf16>
    %cst = arith.constant dense<0.000000e+00> : vector<8x256xf32>
    %2 = tpu.matmul %0, %1, %cst {dimension_numbers = #tpu.dot_dimension_numbers<[1], [0], [0], [1], [0, 0, 1, 1], [], []>} : vector<8x64xbf16>, vector<64x256xbf16>, vector<8x256xf32> -> vector<8x256xf32>
    %c0_3 = arith.constant 0 : index
    %c0_4 = arith.constant 0 : index
    %3 = vector.load %arg3[%c0_3, %c0_4] : memref<1x256xf32, #tpu.memory_space<vmem>>, vector<1x256xf32>
    %4 = vector.broadcast %3 : vector<1x256xf32> to vector<8x256xf32>
    %5 = arith.addf %2, %4 : vector<8x256xf32>
    %cst_5 = arith.constant 0.00999999977 : f32
    %6 = vector.broadcast %cst_5 : f32 to vector<8x256xf32>
    %7 = arith.mulf %6, %5 : vector<8x256xf32>
    %8 = arith.maximumf %5, %7 : vector<8x256xf32>
    %9 = arith.truncf %8 : vector<8x256xf32> to vector<8x256xbf16>
    %c0_6 = arith.constant 0 : index
    %c0_7 = arith.constant 0 : index
    %10 = vector.load %arg4[%c0_6, %c0_7] : memref<256x256xbf16, #tpu.memory_space<vmem>>, vector<256x256xbf16>
    %cst_8 = arith.constant dense<0.000000e+00> : vector<8x256xf32>
    %11 = tpu.matmul %9, %10, %cst_8 {dimension_numbers = #tpu.dot_dimension_numbers<[1], [0], [0], [1], [0, 0, 1, 1], [], []>} : vector<8x256xbf16>, vector<256x256xbf16>, vector<8x256xf32> -> vector<8x256xf32>
    %c0_9 = arith.constant 0 : index
    %c0_10 = arith.constant 0 : index
    %12 = vector.load %arg5[%c0_9, %c0_10] : memref<1x256xf32, #tpu.memory_space<vmem>>, vector<1x256xf32>
    %13 = vector.broadcast %12 : vector<1x256xf32> to vector<8x256xf32>
    %14 = arith.addf %11, %13 : vector<8x256xf32>
    %cst_11 = arith.constant 0.00999999977 : f32
    %15 = vector.broadcast %cst_11 : f32 to vector<8x256xf32>
    %16 = arith.mulf %15, %14 : vector<8x256xf32>
    %17 = arith.maximumf %14, %16 : vector<8x256xf32>
    %18 = arith.truncf %17 : vector<8x256xf32> to vector<8x256xbf16>
    %c0_12 = arith.constant 0 : index
    %c0_13 = arith.constant 0 : index
    %19 = vector.load %arg6[%c0_12, %c0_13] : memref<256x784xbf16, #tpu.memory_space<vmem>>, vector<256x784xbf16>
    %cst_14 = arith.constant dense<0.000000e+00> : vector<8x784xf32>
    %20 = tpu.matmul %18, %19, %cst_14 {dimension_numbers = #tpu.dot_dimension_numbers<[1], [0], [0], [1], [0, 0, 1, 1], [], []>} : vector<8x256xbf16>, vector<256x784xbf16>, vector<8x784xf32> -> vector<8x784xf32>
    %c0_15 = arith.constant 0 : index
    %c0_16 = arith.constant 0 : index
    %21 = vector.load %arg7[%c0_15, %c0_16] : memref<1x784xf32, #tpu.memory_space<vmem>>, vector<1x784xf32>
    %22 = vector.broadcast %21 : vector<1x784xf32> to vector<8x784xf32>
    %23 = arith.addf %20, %22 : vector<8x784xf32>
    %24 = math.tanh %23 : vector<8x784xf32>
    %25 = arith.truncf %24 : vector<8x784xf32> to vector<8x784xbf16>
    %c0_17 = arith.constant 0 : index
    %c0_18 = arith.constant 0 : index
    %26 = vector.load %arg8[%c0_17, %c0_18] : memref<8x784xbf16, #tpu.memory_space<vmem>>, vector<8x784xbf16>
    tpu.vector_store %arg8[%c0_17, %c0_18], %25 {strides = array<i32>} : memref<8x784xbf16, #tpu.memory_space<vmem>>, vector<8x784xbf16>,
    return
  }
  func.func @transform_0(%arg0: i32) -> (i32, i32) {
    %c0_i32 = arith.constant 0 : i32
    %c0_i32_0 = arith.constant 0 : i32
    return %arg0, %c0_i32 : i32, i32
  }
  func.func @transform_1(%arg0: i32) -> (i32, i32) {
    %c0_i32 = arith.constant 0 : i32
    %c0_i32_0 = arith.constant 0 : i32
    %c0_i32_1 = arith.constant 0 : i32
    return %c0_i32, %c0_i32_0 : i32, i32
  }
  func.func @transform_2(%arg0: i32) -> (i32, i32) {
    %c0_i32 = arith.constant 0 : i32
    %c0_i32_0 = arith.constant 0 : i32
    %c0_i32_1 = arith.constant 0 : i32
    return %c0_i32, %c0_i32_0 : i32, i32
  }
  func.func @transform_3(%arg0: i32) -> (i32, i32) {
    %c0_i32 = arith.constant 0 : i32
    %c0_i32_0 = arith.constant 0 : i32
    %c0_i32_1 = arith.constant 0 : i32
    return %c0_i32, %c0_i32_0 : i32, i32
  }
  func.func @transform_4(%arg0: i32) -> (i32, i32) {
    %c0_i32 = arith.constant 0 : i32
    %c0_i32_0 = arith.constant 0 : i32
    %c0_i32_1 = arith.constant 0 : i32
    return %c0_i32, %c0_i32_0 : i32, i32
  }
  func.func @transform_5(%arg0: i32) -> (i32, i32) {
    %c0_i32 = arith.constant 0 : i32
    %c0_i32_0 = arith.constant 0 : i32
    %c0_i32_1 = arith.constant 0 : i32
    return %c0_i32, %c0_i32_0 : i32, i32
  }
  func.func @transform_6(%arg0: i32) -> (i32, i32) {
    %c0_i32 = arith.constant 0 : i32
    %c0_i32_0 = arith.constant 0 : i32
    %c0_i32_1 = arith.constant 0 : i32
    return %c0_i32, %c0_i32_0 : i32, i32
  }
  func.func @transform_7(%arg0: i32) -> (i32, i32) {
    %c0_i32 = arith.constant 0 : i32
    %c0_i32_0 = arith.constant 0 : i32
    return %arg0, %c0_i32 : i32, i32
  }
}

</mosaic_0001>

<llo_original>
// kernel: tpu_custom_call.1
$region0: #{tpu_custom_call.1}
  #allocation0 [shape = 'u32[]', space=smem, size = 0x4, offset = 0x4, fixed_abs, tag = 'smem constant byte address 0x4 - core index']
  #allocation1 [shape = 'u32[144,128]{1,0:T(1,128)}', space=vmem, size = 0x12000, scoped, tag = 'internal scratch']
  %s0 = inlined_call_operand.vmem [shape: bf16[8,64], index: 0, kind: input, shape index: {}]
  %s1 = inlined_call_operand.vmem [shape: bf16[64,256], index: 1, kind: input, shape index: {}]
  %s2 = inlined_call_operand.vmem [shape: f32[1,256], index: 2, kind: input, shape index: {}]
  %s3 = inlined_call_operand.vmem [shape: bf16[256,256], index: 3, kind: input, shape index: {}]
  %s4 = inlined_call_operand.vmem [shape: f32[1,256], index: 4, kind: input, shape index: {}]
  %s5 = inlined_call_operand.vmem [shape: bf16[256,784], index: 5, kind: input, shape index: {}]
  %s6 = inlined_call_operand.vmem [shape: f32[1,784], index: 6, kind: input, shape index: {}]
  %s7 = inlined_call_operand.hbm [shape: bf16[8,784], index: 7, kind: output, shape index: {}]
  %s8 = sld [smem:[#allocation0]]
  $region38: #{tpu_custom_call.1} parent=0
    _
  %s10 = ssub.s32 1, %s8
  %s11 = scalar_select 0, %s10, %s8
  $region1: #{tpu_custom_call.1} parent=0
    #allocation2 [shape = 'u8[14336]{0}', space=vmem, size = 0x3800, scoped, tag = 'output window, operand 0, single buffered']
    #allocation3 [shape = 's32[1]{0}', space=sflag, size = 0x4, scoped, tag = 'scoped memory for tpu_custom_call.1']
    %12 = vsyncpa [#allocation3], 0
    // Predicated region
    $region2: #{tpu_custom_call.1} parent=1 // pred_check
      _
    $region3: #{tpu_custom_call.1} parent=1 // pred_check_branch
      %14 = sbr.rel (0) target = $region5
    $region4: #{tpu_custom_call.1} parent=1 // pred_region
      _
    $region5: #{tpu_custom_call.1} parent=1 // pred_fallthru
      _
    // Predicated region
    $region6: #{tpu_custom_call.1} parent=1 // pred_check
      _
    $region7: #{tpu_custom_call.1} parent=1 // pred_check_branch
      %16 = sbr.rel (0) target = $region9
    $region8: #{tpu_custom_call.1} parent=1 // pred_region
      _
    $region9: #{tpu_custom_call.1} parent=1 // pred_fallthru
      _
    // Predicated region
    $region10: #{tpu_custom_call.1} parent=1 // pred_check
      _
    $region11: #{tpu_custom_call.1} parent=1 // pred_check_branch
      %18 = sbr.rel (0) target = $region13
    $region12: #{tpu_custom_call.1} parent=1 // pred_region
      _
    $region13: #{tpu_custom_call.1} parent=1 // pred_fallthru
      _
    // Predicated region
    $region14: #{tpu_custom_call.1} parent=1 // pred_check
      _
    $region15: #{tpu_custom_call.1} parent=1 // pred_check_branch
      %20 = sbr.rel (0) target = $region17
    $region16: #{tpu_custom_call.1} parent=1 // pred_region
      _
    $region17: #{tpu_custom_call.1} parent=1 // pred_fallthru
      _
    // Predicated region
    $region18: #{tpu_custom_call.1} parent=1 // pred_check
      _
    $region19: #{tpu_custom_call.1} parent=1 // pred_check_branch
      %22 = sbr.rel (0) target = $region21
    $region20: #{tpu_custom_call.1} parent=1 // pred_region
      _
    $region21: #{tpu_custom_call.1} parent=1 // pred_fallthru
      _
    // Predicated region
    $region22: #{tpu_custom_call.1} parent=1 // pred_check
      _
    $region23: #{tpu_custom_call.1} parent=1 // pred_check_branch
      %24 = sbr.rel (0) target = $region25
    $region24: #{tpu_custom_call.1} parent=1 // pred_region
      _
    $region25: #{tpu_custom_call.1} parent=1 // pred_fallthru
      _
    // Predicated region
    $region26: #{tpu_custom_call.1} parent=1 // pred_check
      _
    $region27: #{tpu_custom_call.1} parent=1 // pred_check_branch
      %26 = sbr.rel (0) target = $region29
    $region28: #{tpu_custom_call.1} parent=1 // pred_region
      _
    $region29: #{tpu_custom_call.1} parent=1 // pred_fallthru
      _
    %v28 = vld [vmem:[%s0] sm:$0xf]
    %v29 = vld [vmem:[%s1] sm:$0xff]
    %v30 = vld [vmem:[%s1 + $0x8] sm:$0xff]
    %v31 = vld [vmem:[%s1 + $0x10] sm:$0xff]
    %v32 = vld [vmem:[%s1 + $0x18] sm:$0xff]
    %v33 = vld [vmem:[%s1 + $0x20] sm:$0xff]
    %v34 = vld [vmem:[%s1 + $0x28] sm:$0xff]
    %v35 = vld [vmem:[%s1 + $0x30] sm:$0xff]
    %v36 = vld [vmem:[%s1 + $0x38] sm:$0xff]
    %v37 = vld [vmem:[%s2] sm:$0x3]
    %v39 = vlaneseq
    %v40 = vshrl.u32 %v39, 7
    %v41 = vsub.s32 0, %v40
    %v42 = vrot.slane %v37, %v41
    %v43 = vlaneseq
    %v44 = vshrl.u32 %v43, 7
    %v45 = vsub.s32 1, %v44
    %v46 = vrot.slane %v37, %v45
    %v57 = vunpack.c.l.b16 %v29
    %v58 = vunpack.c.h.b16 %v29
    %v59 = vunpack.c.l.b16 %v30
    %v60 = vunpack.c.h.b16 %v30
    %v61 = vunpack.c.l.b16 %v31
    %v62 = vunpack.c.h.b16 %v31
    %v63 = vunpack.c.l.b16 %v32
    %v64 = vunpack.c.h.b16 %v32
    %v65 = vunpack.c.l.b16 %v33
    %v66 = vunpack.c.h.b16 %v33
    %v67 = vunpack.c.l.b16 %v34
    %v68 = vunpack.c.h.b16 %v34
    %v69 = vunpack.c.l.b16 %v35
    %v70 = vunpack.c.h.b16 %v35
    %v71 = vunpack.c.l.b16 %v36
    %v72 = vunpack.c.h.b16 %v36
    %v73 = vpack.c.b16 %v59, %v57
    %v74 = vpack.c.b16 %v60, %v58
    %v75 = vpack.c.b16 %v63, %v61
    %v76 = vpack.c.b16 %v64, %v62
    %v77 = vpack.c.b16 %v67, %v65
    %v78 = vpack.c.b16 %v68, %v66
    %v79 = vpack.c.b16 %v71, %v69
    %v80 = vpack.c.b16 %v72, %v70
    %vm89 = vcmask 523264
    %v91 = vsel %vm89, %v28, 0
    %93 = vmatprep.subr.bf16.mxu0 %v74
    %94 = vmatpush1.bf16.msra.mxu0 %v73
    %95 = vmatprep.subr.bf16.mxu0 %v76
    %96 = vmatpush1.bf16.msra.mxu0 %v75
    %97 = vmatprep.subr.bf16.mxu0 %v78
    %98 = vmatpush1.bf16.msra.mxu0 %v77
    %99 = vmatprep.subr.bf16.mxu0 %v80
    %100 = vmatpush1.bf16.msra.mxu0 %v79
    %101 = vmatprep.subr.bf16.mxu0 0
    %102 = vmatpush1.bf16.msra.mxu0 0
    %103 = vmatprep.subr.bf16.mxu0 0
    %104 = vmatpush1.bf16.msra.mxu0 0
    %105 = vmatprep.subr.bf16.mxu0 0
    %106 = vmatpush1.bf16.msra.mxu0 0
    %107 = vmatprep.subr.bf16.mxu0 0
    %108 = vmatpush1.bf16.msra.mxu0 0
    %109 = vmatprep.subr.bf16.mxu0 0
    %110 = vmatpush1.bf16.msra.mxu0 0
    %111 = vmatprep.subr.bf16.mxu0 0
    %112 = vmatpush1.bf16.msra.mxu0 0
    %113 = vmatprep.subr.bf16.mxu0 0
    %114 = vmatpush1.bf16.msra.mxu0 0
    %115 = vmatprep.subr.bf16.mxu0 0
    %116 = vmatpush1.bf16.msra.mxu0 0
    %117 = vmatprep.subr.bf16.mxu0 0
    %118 = vmatpush1.bf16.msra.mxu0 0
    %119 = vmatprep.subr.bf16.mxu0 0
    %120 = vmatpush1.bf16.msra.mxu0 0
    %121 = vmatprep.subr.bf16.mxu0 0
    %122 = vmatpush1.bf16.msra.mxu0 0
    %123 = vmatprep.subr.bf16.mxu0 0
    %124 = vmatpush1.bf16.msra.mxu0 0
    %125 = vmatprep.mubr.bf16.mxu0 0
    %126 = vmatmul.mubr.bf16.gmra.mrb[0].mxu0 %v91
    %v127 = vpop.f32.mrb[0].mxu0
    %v128 = vadd.f32 %v42, %v127
    %v129 = vpop.f32.mrb[0].mxu0
    %v130 = vadd.f32 %v46, %v129
    %v131 = vpop.f32.mrb[0].mxu0
    %v132 = vpop.f32.mrb[0].mxu0
    %133 = vdwg.mxu0
    %v134 = vmul.f32 %v128, 0.01
    %v135 = vmul.f32 %v130, 0.01
    %v136 = vmax.f32 %v128, %v134
    %v137 = vmax.f32 %v130, %v135
    %v138 = vpack.c.bf16 %v136, %v136
    %v139 = vpack.c.bf16 %v137, %v137
    %v140 = vld [vmem:[%s3] sm:$0xff]
    %v141 = vld [vmem:[%s3 + $0x8] sm:$0xff]
    %v142 = vld [vmem:[%s3 + $0x10] sm:$0xff]
    %v143 = vld [vmem:[%s3 + $0x18] sm:$0xff]
    %v144 = vld [vmem:[%s3 + $0x20] sm:$0xff]
    %v145 = vld [vmem:[%s3 + $0x28] sm:$0xff]
    %v146 = vld [vmem:[%s3 + $0x30] sm:$0xff]
    %v147 = vld [vmem:[%s3 + $0x38] sm:$0xff]
    %v148 = vld [vmem:[%s3 + $0x40] sm:$0xff]
    %v149 = vld [vmem:[%s3 + $0x48] sm:$0xff]
    %v150 = vld [vmem:[%s3 + $0x50] sm:$0xff]
    %v151 = vld [vmem:[%s3 + $0x58] sm:$0xff]
    %v152 = vld [vmem:[%s3 + $0x60] sm:$0xff]
    %v153 = vld [vmem:[%s3 + $0x68] sm:$0xff]
    %v154 = vld [vmem:[%s3 + $0x70] sm:$0xff]
    %v155 = vld [vmem:[%s3 + $0x78] sm:$0xff]
    %v156 = vld [vmem:[%s3 + $0x80] sm:$0xff]
    %v157 = vld [vmem:[%s3 + $0x88] sm:$0xff]
    %v158 = vld [vmem:[%s3 + $0x90] sm:$0xff]
    %v159 = vld [vmem:[%s3 + $0x98] sm:$0xff]
    %v160 = vld [vmem:[%s3 + $0xa0] sm:$0xff]
    %v161 = vld [vmem:[%s3 + $0xa8] sm:$0xff]
    %v162 = vld [vmem:[%s3 + $0xb0] sm:$0xff]
    %v163 = vld [vmem:[%s3 + $0xb8] sm:$0xff]
    %v164 = vld [vmem:[%s3 + $0xc0] sm:$0xff]
    %v165 = vld [vmem:[%s3 + $0xc8] sm:$0xff]
    %v166 = vld [vmem:[%s3 + $0xd0] sm:$0xff]
    %v167 = vld [vmem:[%s3 + $0xd8] sm:$0xff]
    %v168 = vld [vmem:[%s3 + $0xe0] sm:$0xff]
    %v169 = vld [vmem:[%s3 + $0xe8] sm:$0xff]
    %v170 = vld [vmem:[%s3 + $0xf0] sm:$0xff]
    %v171 = vld [vmem:[%s3 + $0xf8] sm:$0xff]
    %v172 = vld [vmem:[%s4] sm:$0x3]
    %v174 = vlaneseq
    %v175 = vshrl.u32 %v174, 7
    %v176 = vsub.s32 0, %v175
    %v177 = vrot.slane %v172, %v176
    %v178 = vlaneseq
    %v179 = vshrl.u32 %v178, 7
    %v180 = vsub.s32 1, %v179
    %v181 = vrot.slane %v172, %v180
    %v216 = vunpack.c.l.b16 %v140
    %v217 = vunpack.c.h.b16 %v140
    %v218 = vunpack.c.l.b16 %v141
    %v219 = vunpack.c.h.b16 %v141
    %v220 = vunpack.c.l.b16 %v142
    %v221 = vunpack.c.h.b16 %v142
    %v222 = vunpack.c.l.b16 %v143
    %v223 = vunpack.c.h.b16 %v143
    %v224 = vunpack.c.l.b16 %v144
    %v225 = vunpack.c.h.b16 %v144
    %v226 = vunpack.c.l.b16 %v145
    %v227 = vunpack.c.h.b16 %v145
    %v228 = vunpack.c.l.b16 %v146
    %v229 = vunpack.c.h.b16 %v146
    %v230 = vunpack.c.l.b16 %v147
    %v231 = vunpack.c.h.b16 %v147
    %v232 = vunpack.c.l.b16 %v148
    %v233 = vunpack.c.h.b16 %v148
    %v234 = vunpack.c.l.b16 %v149
    %v235 = vunpack.c.h.b16 %v149
    %v236 = vunpack.c.l.b16 %v150
    %v237 = vunpack.c.h.b16 %v150
    %v238 = vunpack.c.l.b16 %v151
    %v239 = vunpack.c.h.b16 %v151
    %v240 = vunpack.c.l.b16 %v152
    %v241 = vunpack.c.h.b16 %v152
    %v242 = vunpack.c.l.b16 %v153
    %v243 = vunpack.c.h.b16 %v153
    %v244 = vunpack.c.l.b16 %v154
    %v245 = vunpack.c.h.b16 %v154
    %v246 = vunpack.c.l.b16 %v155
    %v247 = vunpack.c.h.b16 %v155
    %v248 = vunpack.c.l.b16 %v156
    %v249 = vunpack.c.h.b16 %v156
    %v250 = vunpack.c.l.b16 %v157
    %v251 = vunpack.c.h.b16 %v157
    %v252 = vunpack.c.l.b16 %v158
    %v253 = vunpack.c.h.b16 %v158
    %v254 = vunpack.c.l.b16 %v159
    %v255 = vunpack.c.h.b16 %v159
    %v256 = vunpack.c.l.b16 %v160
    %v257 = vunpack.c.h.b16 %v160
    %v258 = vunpack.c.l.b16 %v161
    %v259 = vunpack.c.h.b16 %v161
    %v260 = vunpack.c.l.b16 %v162
    %v261 = vunpack.c.h.b16 %v162
    %v262 = vunpack.c.l.b16 %v163
    %v263 = vunpack.c.h.b16 %v163
    %v264 = vunpack.c.l.b16 %v164
    %v265 = vunpack.c.h.b16 %v164
    %v266 = vunpack.c.l.b16 %v165
    %v267 = vunpack.c.h.b16 %v165
    %v268 = vunpack.c.l.b16 %v166
    %v269 = vunpack.c.h.b16 %v166
    %v270 = vunpack.c.l.b16 %v167
    %v271 = vunpack.c.h.b16 %v167
    %v272 = vunpack.c.l.b16 %v168
    %v273 = vunpack.c.h.b16 %v168
    %v274 = vunpack.c.l.b16 %v169
    %v275 = vunpack.c.h.b16 %v169
    %v276 = vunpack.c.l.b16 %v170
    %v277 = vunpack.c.h.b16 %v170
    %v278 = vunpack.c.l.b16 %v171
    %v279 = vunpack.c.h.b16 %v171
    %v280 = vpack.c.b16 %v218, %v216
    %v281 = vpack.c.b16 %v219, %v217
    %v282 = vpack.c.b16 %v222, %v220
    %v283 = vpack.c.b16 %v223, %v221
    %v284 = vpack.c.b16 %v226, %v224
    %v285 = vpack.c.b16 %v227, %v225
    %v286 = vpack.c.b16 %v230, %v228
    %v287 = vpack.c.b16 %v231, %v229
    %v288 = vpack.c.b16 %v234, %v232
    %v289 = vpack.c.b16 %v235, %v233
    %v290 = vpack.c.b16 %v238, %v236
    %v291 = vpack.c.b16 %v239, %v237
    %v292 = vpack.c.b16 %v242, %v240
    %v293 = vpack.c.b16 %v243, %v241
    %v294 = vpack.c.b16 %v246, %v244
    %v295 = vpack.c.b16 %v247, %v245
    %v296 = vpack.c.b16 %v250, %v248
    %v297 = vpack.c.b16 %v251, %v249
    %v298 = vpack.c.b16 %v254, %v252
    %v299 = vpack.c.b16 %v255, %v253
    %v300 = vpack.c.b16 %v258, %v256
    %v301 = vpack.c.b16 %v259, %v257
    %v302 = vpack.c.b16 %v262, %v260
    %v303 = vpack.c.b16 %v263, %v261
    %v304 = vpack.c.b16 %v266, %v264
    %v305 = vpack.c.b16 %v267, %v265
    %v306 = vpack.c.b16 %v270, %v268
    %v307 = vpack.c.b16 %v271, %v269
    %v308 = vpack.c.b16 %v274, %v272
    %v309 = vpack.c.b16 %v275, %v273
    %v310 = vpack.c.b16 %v278, %v276
    %v311 = vpack.c.b16 %v279, %v277
    %344 = vmatprep.subr.bf16.mxu0 %v281
    %345 = vmatpush1.bf16.msra.mxu0 %v280
    %346 = vmatprep.subr.bf16.mxu0 %v283
    %347 = vmatpush1.bf16.msra.mxu0 %v282
    %348 = vmatprep.subr.bf16.mxu0 %v285
    %349 = vmatpush1.bf16.msra.mxu0 %v284
    %350 = vmatprep.subr.bf16.mxu0 %v287
    %351 = vmatpush1.bf16.msra.mxu0 %v286
    %352 = vmatprep.subr.bf16.mxu0 %v289
    %353 = vmatpush1.bf16.msra.mxu0 %v288
    %354 = vmatprep.subr.bf16.mxu0 %v291
    %355 = vmatpush1.bf16.msra.mxu0 %v290
    %356 = vmatprep.subr.bf16.mxu0 %v293
    %357 = vmatpush1.bf16.msra.mxu0 %v292
    %358 = vmatprep.subr.bf16.mxu0 %v295
    %359 = vmatpush1.bf16.msra.mxu0 %v294
    %360 = vmatprep.subr.bf16.mxu0 %v297
    %361 = vmatpush1.bf16.msra.mxu0 %v296
    %362 = vmatprep.subr.bf16.mxu0 %v299
    %363 = vmatpush1.bf16.msra.mxu0 %v298
    %364 = vmatprep.subr.bf16.mxu0 %v301
    %365 = vmatpush1.bf16.msra.mxu0 %v300
    %366 = vmatprep.subr.bf16.mxu0 %v303
    %367 = vmatpush1.bf16.msra.mxu0 %v302
    %368 = vmatprep.subr.bf16.mxu0 %v305
    %369 = vmatpush1.bf16.msra.mxu0 %v304
    %370 = vmatprep.subr.bf16.mxu0 %v307
    %371 = vmatpush1.bf16.msra.mxu0 %v306
    %372 = vmatprep.subr.bf16.mxu0 %v309
    %373 = vmatpush1.bf16.msra.mxu0 %v308
    %374 = vmatprep.subr.bf16.mxu0 %v311
    %375 = vmatpush1.bf16.msra.mxu0 %v310
    %376 = vmatprep.mubr.bf16.mxu0 %v139
    %377 = vmatmul.mubr.bf16.gmra.mrb[0].mxu0 %v138
    %v378 = vpop.f32.mrb[0].mxu0
    %v379 = vadd.f32 %v177, %v378
    %v380 = vpop.f32.mrb[0].mxu0
    %v381 = vadd.f32 %v181, %v380
    %v382 = vpop.f32.mrb[0].mxu0
    %v383 = vpop.f32.mrb[0].mxu0
    %384 = vdwg.mxu0
    %v385 = vmul.f32 %v379, 0.01
    %v386 = vmul.f32 %v381, 0.01
    %v387 = vmax.f32 %v379, %v385
    %v388 = vmax.f32 %v381, %v386
    %v389 = vpack.c.bf16 %v387, %v387
    %v390 = vpack.c.bf16 %v388, %v388
    %v391 = vld [vmem:[%s5] sm:$0xff]
    %v392 = vld [vmem:[%s5 + $0x8] sm:$0xff]
    %v393 = vld [vmem:[%s5 + $0x10] sm:$0xff]
    %v394 = vld [vmem:[%s5 + $0x18] sm:$0xf]
    %v395 = vld [vmem:[%s5 + $0x1c] sm:$0xff]
    %v396 = vld [vmem:[%s5 + $0x24] sm:$0xff]
    %v397 = vld [vmem:[%s5 + $0x2c] sm:$0xff]
    %v398 = vld [vmem:[%s5 + $0x34] sm:$0xf]
    %v399 = vld [vmem:[%s5 + $0x38] sm:$0xff]
    %v400 = vld [vmem:[%s5 + $0x40] sm:$0xff]
    %v401 = vld [vmem:[%s5 + $0x48] sm:$0xff]
    %v402 = vld [vmem:[%s5 + $0x50] sm:$0xf]
    %v403 = vld [vmem:[%s5 + $0x54] sm:$0xff]
    %v404 = vld [vmem:[%s5 + $0x5c] sm:$0xff]
    %v405 = vld [vmem:[%s5 + $0x64] sm:$0xff]
    %v406 = vld [vmem:[%s5 + $0x6c] sm:$0xf]
    %v407 = vld [vmem:[%s5 + $0x70] sm:$0xff]
    %v408 = vld [vmem:[%s5 + $0x78] sm:$0xff]
    %v409 = vld [vmem:[%s5 + $0x80] sm:$0xff]
    %v410 = vld [vmem:[%s5 + $0x88] sm:$0xf]
    %v411 = vld [vmem:[%s5 + $0x8c] sm:$0xff]
    %v412 = vld [vmem:[%s5 + $0x94] sm:$0xff]
    %v413 = vld [vmem:[%s5 + $0x9c] sm:$0xff]
    %v414 = vld [vmem:[%s5 + $0xa4] sm:$0xf]
    %v415 = vld [vmem:[%s5 + $0xa8] sm:$0xff]
    %v416 = vld [vmem:[%s5 + $0xb0] sm:$0xff]
    %v417 = vld [vmem:[%s5 + $0xb8] sm:$0xff]
    %v418 = vld [vmem:[%s5 + $0xc0] sm:$0xf]
    %v419 = vld [vmem:[%s5 + $0xc4] sm:$0xff]
    %v420 = vld [vmem:[%s5 + $0xcc] sm:$0xff]
    %v421 = vld [vmem:[%s5 + $0xd4] sm:$0xff]
    %v422 = vld [vmem:[%s5 + $0xdc] sm:$0xf]
    %v423 = vld [vmem:[%s5 + $0xe0] sm:$0xff]
    %v424 = vld [vmem:[%s5 + $0xe8] sm:$0xff]
    %v425 = vld [vmem:[%s5 + $0xf0] sm:$0xff]
    %v426 = vld [vmem:[%s5 + $0xf8] sm:$0xf]
    %v427 = vld [vmem:[%s5 + $0xfc] sm:$0xff]
    %v428 = vld [vmem:[%s5 + $0x104] sm:$0xff]
    %v429 = vld [vmem:[%s5 + $0x10c] sm:$0xff]
    %v430 = vld [vmem:[%s5 + $0x114] sm:$0xf]
    %v431 = vld [vmem:[%s5 + $0x118] sm:$0xff]
    %v432 = vld [vmem:[%s5 + $0x120] sm:$0xff]
    %v433 = vld [vmem:[%s5 + $0x128] sm:$0xff]
    %v434 = vld [vmem:[%s5 + $0x130] sm:$0xf]
    %v435 = vld [vmem:[%s5 + $0x134] sm:$0xff]
    %v436 = vld [vmem:[%s5 + $0x13c] sm:$0xff]
    %v437 = vld [vmem:[%s5 + $0x144] sm:$0xff]
    %v438 = vld [vmem:[%s5 + $0x14c] sm:$0xf]
    %v439 = vld [vmem:[%s5 + $0x150] sm:$0xff]
    %v440 = vld [vmem:[%s5 + $0x158] sm:$0xff]
    %v441 = vld [vmem:[%s5 + $0x160] sm:$0xff]
    %v442 = vld [vmem:[%s5 + $0x168] sm:$0xf]
    %v443 = vld [vmem:[%s5 + $0x16c] sm:$0xff]
    %v444 = vld [vmem:[%s5 + $0x174] sm:$0xff]
    %v445 = vld [vmem:[%s5 + $0x17c] sm:$0xff]
    %v446 = vld [vmem:[%s5 + $0x184] sm:$0xf]
    %v447 = vld [vmem:[%s5 + $0x188] sm:$0xff]
    %v448 = vld [vmem:[%s5 + $0x190] sm:$0xff]
    %v449 = vld [vmem:[%s5 + $0x198] sm:$0xff]
    %v450 = vld [vmem:[%s5 + $0x1a0] sm:$0xf]
    %v451 = vld [vmem:[%s5 + $0x1a4] sm:$0xff]
    %v452 = vld [vmem:[%s5 + $0x1ac] sm:$0xff]
    %v453 = vld [vmem:[%s5 + $0x1b4] sm:$0xff]
    %v454 = vld [vmem:[%s5 + $0x1bc] sm:$0xf]
    %v455 = vld [vmem:[%s5 + $0x1c0] sm:$0xff]
    %v456 = vld [vmem:[%s5 + $0x1c8] sm:$0xff]
    %v457 = vld [vmem:[%s5 + $0x1d0] sm:$0xff]
    %v458 = vld [vmem:[%s5 + $0x1d8] sm:$0xf]
    %v459 = vld [vmem:[%s5 + $0x1dc] sm:$0xff]
    %v460 = vld [vmem:[%s5 + $0x1e4] sm:$0xff]
    %v461 = vld [vmem:[%s5 + $0x1ec] sm:$0xff]
    %v462 = vld [vmem:[%s5 + $0x1f4] sm:$0xf]
    %v463 = vld [vmem:[%s5 + $0x1f8] sm:$0xff]
    %v464 = vld [vmem:[%s5 + $0x200] sm:$0xff]
    %v465 = vld [vmem:[%s5 + $0x208] sm:$0xff]
    %v466 = vld [vmem:[%s5 + $0x210] sm:$0xf]
    %v467 = vld [vmem:[%s5 + $0x214] sm:$0xff]
    %v468 = vld [vmem:[%s5 + $0x21c] sm:$0xff]
    %v469 = vld [vmem:[%s5 + $0x224] sm:$0xff]
    %v470 = vld [vmem:[%s5 + $0x22c] sm:$0xf]
    %v471 = vld [vmem:[%s5 + $0x230] sm:$0xff]
    %v472 = vld [vmem:[%s5 + $0x238] sm:$0xff]
    %v473 = vld [vmem:[%s5 + $0x240] sm:$0xff]
    %v474 = vld [vmem:[%s5 + $0x248] sm:$0xf]
    %v475 = vld [vmem:[%s5 + $0x24c] sm:$0xff]
    %v476 = vld [vmem:[%s5 + $0x254] sm:$0xff]
    %v477 = vld [vmem:[%s5 + $0x25c] sm:$0xff]
    %v478 = vld [vmem:[%s5 + $0x264] sm:$0xf]
    %v479 = vld [vmem:[%s5 + $0x268] sm:$0xff]
    %v480 = vld [vmem:[%s5 + $0x270] sm:$0xff]
    %v481 = vld [vmem:[%s5 + $0x278] sm:$0xff]
    %v482 = vld [vmem:[%s5 + $0x280] sm:$0xf]
    %v483 = vld [vmem:[%s5 + $0x284] sm:$0xff]
    %v484 = vld [vmem:[%s5 + $0x28c] sm:$0xff]
    %v485 = vld [vmem:[%s5 + $0x294] sm:$0xff]
    %v486 = vld [vmem:[%s5 + $0x29c] sm:$0xf]
    %v487 = vld [vmem:[%s5 + $0x2a0] sm:$0xff]
    %v488 = vld [vmem:[%s5 + $0x2a8] sm:$0xff]
    %v489 = vld [vmem:[%s5 + $0x2b0] sm:$0xff]
    %v490 = vld [vmem:[%s5 + $0x2b8] sm:$0xf]
    %v491 = vld [vmem:[%s5 + $0x2bc] sm:$0xff]
    %v492 = vld [vmem:[%s5 + $0x2c4] sm:$0xff]
    %v493 = vld [vmem:[%s5 + $0x2cc] sm:$0xff]
    %v494 = vld [vmem:[%s5 + $0x2d4] sm:$0xf]
    %v495 = vld [vmem:[%s5 + $0x2d8] sm:$0xff]
    %v496 = vld [vmem:[%s5 + $0x2e0] sm:$0xff]
    %v497 = vld [vmem:[%s5 + $0x2e8] sm:$0xff]
    %v498 = vld [vmem:[%s5 + $0x2f0] sm:$0xf]
    %v499 = vld [vmem:[%s5 + $0x2f4] sm:$0xff]
    %v500 = vld [vmem:[%s5 + $0x2fc] sm:$0xff]
    %v501 = vld [vmem:[%s5 + $0x304] sm:$0xff]
    %v502 = vld [vmem:[%s5 + $0x30c] sm:$0xf]
    %v503 = vld [vmem:[%s5 + $0x310] sm:$0xff]
    %v504 = vld [vmem:[%s5 + $0x318] sm:$0xff]
    %v505 = vld [vmem:[%s5 + $0x320] sm:$0xff]
    %v506 = vld [vmem:[%s5 + $0x328] sm:$0xf]
    %v507 = vld [vmem:[%s5 + $0x32c] sm:$0xff]
    %v508 = vld [vmem:[%s5 + $0x334] sm:$0xff]
    %v509 = vld [vmem:[%s5 + $0x33c] sm:$0xff]
    %v510 = vld [vmem:[%s5 + $0x344] sm:$0xf]
    %v511 = vld [vmem:[%s5 + $0x348] sm:$0xff]
    %v512 = vld [vmem:[%s5 + $0x350] sm:$0xff]
    %v513 = vld [vmem:[%s5 + $0x358] sm:$0xff]
    %v514 = vld [vmem:[%s5 + $0x360] sm:$0xf]
    %v515 = vld [vmem:[%s5 + $0x364] sm:$0xff]
    %v516 = vld [vmem:[%s5 + $0x36c] sm:$0xff]
    %v517 = vld [vmem:[%s5 + $0x374] sm:$0xff]
    %v518 = vld [vmem:[%s5 + $0x37c] sm:$0xf]
    %v519 = vld [vmem:[%s6] sm:$0x7f]
    %v521 = vlaneseq
    %v522 = vshrl.u32 %v521, 7
    %v523 = vsub.s32 0, %v522
    %v524 = vrot.slane %v519, %v523
    %v525 = vlaneseq
    %v526 = vshrl.u32 %v525, 7
    %v527 = vsub.s32 1, %v526
    %v528 = vrot.slane %v519, %v527
    %v529 = vlaneseq
    %v530 = vshrl.u32 %v529, 7
    %v531 = vsub.s32 2, %v530
    %v532 = vrot.slane %v519, %v531
    %v533 = vlaneseq
    %v534 = vshrl.u32 %v533, 7
    %v535 = vsub.s32 3, %v534
    %v536 = vrot.slane %v519, %v535
    %v537 = vlaneseq
    %v538 = vshrl.u32 %v537, 7
    %v539 = vsub.s32 4, %v538
    %v540 = vrot.slane %v519, %v539
    %v541 = vlaneseq
    %v542 = vshrl.u32 %v541, 7
    %v543 = vsub.s32 5, %v542
    %v544 = vrot.slane %v519, %v543
    %v545 = vlaneseq
    %v546 = vshrl.u32 %v545, 7
    %v547 = vsub.s32 6, %v546
    %v548 = vrot.slane %v519, %v547
    %v684 = vunpack.c.l.b16 %v391
    %v685 = vunpack.c.h.b16 %v391
    %v686 = vunpack.c.l.b16 %v392
    %v687 = vunpack.c.h.b16 %v392
    %v688 = vunpack.c.l.b16 %v393
    %v689 = vunpack.c.h.b16 %v393
    %v690 = vunpack.c.l.b16 %v394
    %v691 = vunpack.c.l.b16 %v395
    %v692 = vunpack.c.h.b16 %v395
    %v693 = vunpack.c.l.b16 %v396
    %v694 = vunpack.c.h.b16 %v396
    %v695 = vunpack.c.l.b16 %v397
    %v696 = vunpack.c.h.b16 %v397
    %v697 = vunpack.c.l.b16 %v398
    %v698 = vunpack.c.l.b16 %v399
    %v699 = vunpack.c.h.b16 %v399
    %v700 = vunpack.c.l.b16 %v400
    %v701 = vunpack.c.h.b16 %v400
    %v702 = vunpack.c.l.b16 %v401
    %v703 = vunpack.c.h.b16 %v401
    %v704 = vunpack.c.l.b16 %v402
    %v705 = vunpack.c.l.b16 %v403
    %v706 = vunpack.c.h.b16 %v403
    %v707 = vunpack.c.l.b16 %v404
    %v708 = vunpack.c.h.b16 %v404
    %v709 = vunpack.c.l.b16 %v405
    %v710 = vunpack.c.h.b16 %v405
    %v711 = vunpack.c.l.b16 %v406
    %v712 = vunpack.c.l.b16 %v407
    %v713 = vunpack.c.h.b16 %v407
    %v714 = vunpack.c.l.b16 %v408
    %v715 = vunpack.c.h.b16 %v408
    %v716 = vunpack.c.l.b16 %v409
    %v717 = vunpack.c.h.b16 %v409
    %v718 = vunpack.c.l.b16 %v410
    %v719 = vunpack.c.l.b16 %v411
    %v720 = vunpack.c.h.b16 %v411
    %v721 = vunpack.c.l.b16 %v412
    %v722 = vunpack.c.h.b16 %v412
    %v723 = vunpack.c.l.b16 %v413
    %v724 = vunpack.c.h.b16 %v413
    %v725 = vunpack.c.l.b16 %v414
    %v726 = vunpack.c.l.b16 %v415
    %v727 = vunpack.c.h.b16 %v415
    %v728 = vunpack.c.l.b16 %v416
    %v729 = vunpack.c.h.b16 %v416
    %v730 = vunpack.c.l.b16 %v417
    %v731 = vunpack.c.h.b16 %v417
    %v732 = vunpack.c.l.b16 %v418
    %v733 = vunpack.c.l.b16 %v419
    %v734 = vunpack.c.h.b16 %v419
    %v735 = vunpack.c.l.b16 %v420
    %v736 = vunpack.c.h.b16 %v420
    %v737 = vunpack.c.l.b16 %v421
    %v738 = vunpack.c.h.b16 %v421
    %v739 = vunpack.c.l.b16 %v422
    %v740 = vunpack.c.l.b16 %v423
    %v741 = vunpack.c.h.b16 %v423
    %v742 = vunpack.c.l.b16 %v424
    %v743 = vunpack.c.h.b16 %v424
    %v744 = vunpack.c.l.b16 %v425
    %v745 = vunpack.c.h.b16 %v425
    %v746 = vunpack.c.l.b16 %v426
    %v747 = vunpack.c.l.b16 %v427
    %v748 = vunpack.c.h.b16 %v427
    %v749 = vunpack.c.l.b16 %v428
    %v750 = vunpack.c.h.b16 %v428
    %v751 = vunpack.c.l.b16 %v429
    %v752 = vunpack.c.h.b16 %v429
    %v753 = vunpack.c.l.b16 %v430
    %v754 = vunpack.c.l.b16 %v431
    %v755 = vunpack.c.h.b16 %v431
    %v756 = vunpack.c.l.b16 %v432
    %v757 = vunpack.c.h.b16 %v432
    %v758 = vunpack.c.l.b16 %v433
    %v759 = vunpack.c.h.b16 %v433
    %v760 = vunpack.c.l.b16 %v434
    %v761 = vunpack.c.l.b16 %v435
    %v762 = vunpack.c.h.b16 %v435
    %v763 = vunpack.c.l.b16 %v436
    %v764 = vunpack.c.h.b16 %v436
    %v765 = vunpack.c.l.b16 %v437
    %v766 = vunpack.c.h.b16 %v437
    %v767 = vunpack.c.l.b16 %v438
    %v768 = vunpack.c.l.b16 %v439
    %v769 = vunpack.c.h.b16 %v439
    %v770 = vunpack.c.l.b16 %v440
    %v771 = vunpack.c.h.b16 %v440
    %v772 = vunpack.c.l.b16 %v441
    %v773 = vunpack.c.h.b16 %v441
    %v774 = vunpack.c.l.b16 %v442
    %v775 = vunpack.c.l.b16 %v443
    %v776 = vunpack.c.h.b16 %v443
    %v777 = vunpack.c.l.b16 %v444
    %v778 = vunpack.c.h.b16 %v444
    %v779 = vunpack.c.l.b16 %v445
    %v780 = vunpack.c.h.b16 %v445
    %v781 = vunpack.c.l.b16 %v446
    %v782 = vunpack.c.l.b16 %v447
    %v783 = vunpack.c.h.b16 %v447
    %v784 = vunpack.c.l.b16 %v448
    %v785 = vunpack.c.h.b16 %v448
    %v786 = vunpack.c.l.b16 %v449
    %v787 = vunpack.c.h.b16 %v449
    %v788 = vunpack.c.l.b16 %v450
    %v789 = vunpack.c.l.b16 %v451
    %v790 = vunpack.c.h.b16 %v451
    %v791 = vunpack.c.l.b16 %v452
    %v792 = vunpack.c.h.b16 %v452
    %v793 = vunpack.c.l.b16 %v453
    %v794 = vunpack.c.h.b16 %v453
    %v795 = vunpack.c.l.b16 %v454
    %v796 = vunpack.c.l.b16 %v455
    %v797 = vunpack.c.h.b16 %v455
    %v798 = vunpack.c.l.b16 %v456
    %v799 = vunpack.c.h.b16 %v456
    %v800 = vunpack.c.l.b16 %v457
    %v801 = vunpack.c.h.b16 %v457
    %v802 = vunpack.c.l.b16 %v458
    %v803 = vunpack.c.l.b16 %v459
    %v804 = vunpack.c.h.b16 %v459
    %v805 = vunpack.c.l.b16 %v460
    %v806 = vunpack.c.h.b16 %v460
    %v807 = vunpack.c.l.b16 %v461
    %v808 = vunpack.c.h.b16 %v461
    %v809 = vunpack.c.l.b16 %v462
    %v810 = vunpack.c.l.b16 %v463
    %v811 = vunpack.c.h.b16 %v463
    %v812 = vunpack.c.l.b16 %v464
    %v813 = vunpack.c.h.b16 %v464
    %v814 = vunpack.c.l.b16 %v465
    %v815 = vunpack.c.h.b16 %v465
    %v816 = vunpack.c.l.b16 %v466
    %v817 = vunpack.c.l.b16 %v467
    %v818 = vunpack.c.h.b16 %v467
    %v819 = vunpack.c.l.b16 %v468
    %v820 = vunpack.c.h.b16 %v468
    %v821 = vunpack.c.l.b16 %v469
    %v822 = vunpack.c.h.b16 %v469
    %v823 = vunpack.c.l.b16 %v470
    %v824 = vunpack.c.l.b16 %v471
    %v825 = vunpack.c.h.b16 %v471
    %v826 = vunpack.c.l.b16 %v472
    %v827 = vunpack.c.h.b16 %v472
    %v828 = vunpack.c.l.b16 %v473
    %v829 = vunpack.c.h.b16 %v473
    %v830 = vunpack.c.l.b16 %v474
    %v831 = vunpack.c.l.b16 %v475
    %v832 = vunpack.c.h.b16 %v475
    %v833 = vunpack.c.l.b16 %v476
    %v834 = vunpack.c.h.b16 %v476
    %v835 = vunpack.c.l.b16 %v477
    %v836 = vunpack.c.h.b16 %v477
    %v837 = vunpack.c.l.b16 %v478
    %v838 = vunpack.c.l.b16 %v479
    %v839 = vunpack.c.h.b16 %v479
    %v840 = vunpack.c.l.b16 %v480
    %v841 = vunpack.c.h.b16 %v480
    %v842 = vunpack.c.l.b16 %v481
    %v843 = vunpack.c.h.b16 %v481
    %v844 = vunpack.c.l.b16 %v482
    %v845 = vunpack.c.l.b16 %v483
    %v846 = vunpack.c.h.b16 %v483
    %v847 = vunpack.c.l.b16 %v484
    %v848 = vunpack.c.h.b16 %v484
    %v849 = vunpack.c.l.b16 %v485
    %v850 = vunpack.c.h.b16 %v485
    %v851 = vunpack.c.l.b16 %v486
    %v852 = vunpack.c.l.b16 %v487
    %v853 = vunpack.c.h.b16 %v487
    %v854 = vunpack.c.l.b16 %v488
    %v855 = vunpack.c.h.b16 %v488
    %v856 = vunpack.c.l.b16 %v489
    %v857 = vunpack.c.h.b16 %v489
    %v858 = vunpack.c.l.b16 %v490
    %v859 = vunpack.c.l.b16 %v491
    %v860 = vunpack.c.h.b16 %v491
    %v861 = vunpack.c.l.b16 %v492
    %v862 = vunpack.c.h.b16 %v492
    %v863 = vunpack.c.l.b16 %v493
    %v864 = vunpack.c.h.b16 %v493
    %v865 = vunpack.c.l.b16 %v494
    %v866 = vunpack.c.l.b16 %v495
    %v867 = vunpack.c.h.b16 %v495
    %v868 = vunpack.c.l.b16 %v496
    %v869 = vunpack.c.h.b16 %v496
    %v870 = vunpack.c.l.b16 %v497
    %v871 = vunpack.c.h.b16 %v497
    %v872 = vunpack.c.l.b16 %v498
    %v873 = vunpack.c.l.b16 %v499
    %v874 = vunpack.c.h.b16 %v499
    %v875 = vunpack.c.l.b16 %v500
    %v876 = vunpack.c.h.b16 %v500
    %v877 = vunpack.c.l.b16 %v501
    %v878 = vunpack.c.h.b16 %v501
    %v879 = vunpack.c.l.b16 %v502
    %v880 = vunpack.c.l.b16 %v503
    %v881 = vunpack.c.h.b16 %v503
    %v882 = vunpack.c.l.b16 %v504
    %v883 = vunpack.c.h.b16 %v504
    %v884 = vunpack.c.l.b16 %v505
    %v885 = vunpack.c.h.b16 %v505
    %v886 = vunpack.c.l.b16 %v506
    %v887 = vunpack.c.l.b16 %v507
    %v888 = vunpack.c.h.b16 %v507
    %v889 = vunpack.c.l.b16 %v508
    %v890 = vunpack.c.h.b16 %v508
    %v891 = vunpack.c.l.b16 %v509
    %v892 = vunpack.c.h.b16 %v509
    %v893 = vunpack.c.l.b16 %v510
    %v894 = vunpack.c.l.b16 %v511
    %v895 = vunpack.c.h.b16 %v511
    %v896 = vunpack.c.l.b16 %v512
    %v897 = vunpack.c.h.b16 %v512
    %v898 = vunpack.c.l.b16 %v513
    %v899 = vunpack.c.h.b16 %v513
    %v900 = vunpack.c.l.b16 %v514
    %v901 = vunpack.c.l.b16 %v515
    %v902 = vunpack.c.h.b16 %v515
    %v903 = vunpack.c.l.b16 %v516
    %v904 = vunpack.c.h.b16 %v516
    %v905 = vunpack.c.l.b16 %v517
    %v906 = vunpack.c.h.b16 %v517
    %v907 = vunpack.c.l.b16 %v518
    %v908 = vpack.c.b16 %v691, %v684
    %v909 = vpack.c.b16 %v692, %v685
    %v910 = vpack.c.b16 %v693, %v686
    %v911 = vpack.c.b16 %v694, %v687
    %v912 = vpack.c.b16 %v695, %v688
    %v913 = vpack.c.b16 %v696, %v689
    %v914 = vpack.c.b16 %v697, %v690
    %v915 = vpack.c.b16 %v705, %v698
    %v916 = vpack.c.b16 %v706, %v699
    %v917 = vpack.c.b16 %v707, %v700
    %v918 = vpack.c.b16 %v708, %v701
    %v919 = vpack.c.b16 %v709, %v702
    %v920 = vpack.c.b16 %v710, %v703
    %v921 = vpack.c.b16 %v711, %v704
    %v922 = vpack.c.b16 %v719, %v712
    %v923 = vpack.c.b16 %v720, %v713
    %v924 = vpack.c.b16 %v721, %v714
    %v925 = vpack.c.b16 %v722, %v715
    %v926 = vpack.c.b16 %v723, %v716
    %v927 = vpack.c.b16 %v724, %v717
    %v928 = vpack.c.b16 %v725, %v718
    %v929 = vpack.c.b16 %v733, %v726
    %v930 = vpack.c.b16 %v734, %v727
    %v931 = vpack.c.b16 %v735, %v728
    %v932 = vpack.c.b16 %v736, %v729
    %v933 = vpack.c.b16 %v737, %v730
    %v934 = vpack.c.b16 %v738, %v731
    %v935 = vpack.c.b16 %v739, %v732
    %v936 = vpack.c.b16 %v747, %v740
    %v937 = vpack.c.b16 %v748, %v741
    %v938 = vpack.c.b16 %v749, %v742
    %v939 = vpack.c.b16 %v750, %v743
    %v940 = vpack.c.b16 %v751, %v744
    %v941 = vpack.c.b16 %v752, %v745
    %v942 = vpack.c.b16 %v753, %v746
    %v943 = vpack.c.b16 %v761, %v754
    %v944 = vpack.c.b16 %v762, %v755
    %v945 = vpack.c.b16 %v763, %v756
    %v946 = vpack.c.b16 %v764, %v757
    %v947 = vpack.c.b16 %v765, %v758
    %v948 = vpack.c.b16 %v766, %v759
    %v949 = vpack.c.b16 %v767, %v760
    %v950 = vpack.c.b16 %v775, %v768
    %v951 = vpack.c.b16 %v776, %v769
    %v952 = vpack.c.b16 %v777, %v770
    %v953 = vpack.c.b16 %v778, %v771
    %v954 = vpack.c.b16 %v779, %v772
    %v955 = vpack.c.b16 %v780, %v773
    %v956 = vpack.c.b16 %v781, %v774
    %v957 = vpack.c.b16 %v789, %v782
    %v958 = vpack.c.b16 %v790, %v783
    %v959 = vpack.c.b16 %v791, %v784
    %v960 = vpack.c.b16 %v792, %v785
    %v961 = vpack.c.b16 %v793, %v786
    %v962 = vpack.c.b16 %v794, %v787
    %v963 = vpack.c.b16 %v795, %v788
    %v964 = vpack.c.b16 %v803, %v796
    %v965 = vpack.c.b16 %v804, %v797
    %v966 = vpack.c.b16 %v805, %v798
    %v967 = vpack.c.b16 %v806, %v799
    %v968 = vpack.c.b16 %v807, %v800
    %v969 = vpack.c.b16 %v808, %v801
    %v970 = vpack.c.b16 %v809, %v802
    %v971 = vpack.c.b16 %v817, %v810
    %v972 = vpack.c.b16 %v818, %v811
    %v973 = vpack.c.b16 %v819, %v812
    %v974 = vpack.c.b16 %v820, %v813
    %v975 = vpack.c.b16 %v821, %v814
    %v976 = vpack.c.b16 %v822, %v815
    %v977 = vpack.c.b16 %v823, %v816
    %v978 = vpack.c.b16 %v831, %v824
    %v979 = vpack.c.b16 %v832, %v825
    %v980 = vpack.c.b16 %v833, %v826
    %v981 = vpack.c.b16 %v834, %v827
    %v982 = vpack.c.b16 %v835, %v828
    %v983 = vpack.c.b16 %v836, %v829
    %v984 = vpack.c.b16 %v837, %v830
    %v985 = vpack.c.b16 %v845, %v838
    %v986 = vpack.c.b16 %v846, %v839
    %v987 = vpack.c.b16 %v847, %v840
    %v988 = vpack.c.b16 %v848, %v841
    %v989 = vpack.c.b16 %v849, %v842
    %v990 = vpack.c.b16 %v850, %v843
    %v991 = vpack.c.b16 %v851, %v844
    %v992 = vpack.c.b16 %v859, %v852
    %v993 = vpack.c.b16 %v860, %v853
    %v994 = vpack.c.b16 %v861, %v854
    %v995 = vpack.c.b16 %v862, %v855
    %v996 = vpack.c.b16 %v863, %v856
    %v997 = vpack.c.b16 %v864, %v857
    %v998 = vpack.c.b16 %v865, %v858
    %v999 = vpack.c.b16 %v873, %v866
    %v1000 = vpack.c.b16 %v874, %v867
    %v1001 = vpack.c.b16 %v875, %v868
    %v1002 = vpack.c.b16 %v876, %v869
    %v1003 = vpack.c.b16 %v877, %v870
    %v1004 = vpack.c.b16 %v878, %v871
    %v1005 = vpack.c.b16 %v879, %v872
    %v1006 = vpack.c.b16 %v887, %v880
    %v1007 = vpack.c.b16 %v888, %v881
    %v1008 = vpack.c.b16 %v889, %v882
    %v1009 = vpack.c.b16 %v890, %v883
    %v1010 = vpack.c.b16 %v891, %v884
    %v1011 = vpack.c.b16 %v892, %v885
    %v1012 = vpack.c.b16 %v893, %v886
    %v1013 = vpack.c.b16 %v901, %v894
    %v1014 = vpack.c.b16 %v902, %v895
    %v1015 = vpack.c.b16 %v903, %v896
    %v1016 = vpack.c.b16 %v904, %v897
    %v1017 = vpack.c.b16 %v905, %v898
    %v1018 = vpack.c.b16 %v906, %v899
    %v1019 = vpack.c.b16 %v907, %v900
    %1132 = vmatprep.subr.bf16.mxu0 %v909
    %1133 = vmatpush1.bf16.msra.mxu0 %v908
    %1134 = vmatprep.subr.bf16.mxu0 %v916
    %1135 = vmatpush1.bf16.msra.mxu0 %v915
    %1136 = vmatprep.subr.bf16.mxu0 %v923
    %1137 = vmatpush1.bf16.msra.mxu0 %v922
    %1138 = vmatprep.subr.bf16.mxu0 %v930
    %1139 = vmatpush1.bf16.msra.mxu0 %v929
    %1140 = vmatprep.subr.bf16.mxu0 %v937
    %1141 = vmatpush1.bf16.msra.mxu0 %v936
    %1142 = vmatprep.subr.bf16.mxu0 %v944
    %1143 = vmatpush1.bf16.msra.mxu0 %v943
    %1144 = vmatprep.subr.bf16.mxu0 %v951
    %1145 = vmatpush1.bf16.msra.mxu0 %v950
    %1146 = vmatprep.subr.bf16.mxu0 %v958
    %1147 = vmatpush1.bf16.msra.mxu0 %v957
    %1148 = vmatprep.subr.bf16.mxu0 %v965
    %1149 = vmatpush1.bf16.msra.mxu0 %v964
    %1150 = vmatprep.subr.bf16.mxu0 %v972
    %1151 = vmatpush1.bf16.msra.mxu0 %v971
    %1152 = vmatprep.subr.bf16.mxu0 %v979
    %1153 = vmatpush1.bf16.msra.mxu0 %v978
    %1154 = vmatprep.subr.bf16.mxu0 %v986
    %1155 = vmatpush1.bf16.msra.mxu0 %v985
    %1156 = vmatprep.subr.bf16.mxu0 %v993
    %1157 = vmatpush1.bf16.msra.mxu0 %v992
    %1158 = vmatprep.subr.bf16.mxu0 %v1000
    %1159 = vmatpush1.bf16.msra.mxu0 %v999
    %1160 = vmatprep.subr.bf16.mxu0 %v1007
    %1161 = vmatpush1.bf16.msra.mxu0 %v1006
    %1162 = vmatprep.subr.bf16.mxu0 %v1014
    %1163 = vmatpush1.bf16.msra.mxu0 %v1013
    %1164 = vmatprep.mubr.bf16.mxu0 %v390
    %1165 = vmatmul.mubr.bf16.gmra.mrb[0].mxu0 %v389
    %v1166 = vpop.f32.mrb[0].mxu0
    %v1167 = vadd.f32 %v524, %v1166
    %v1168 = vpop.f32.mrb[0].mxu0
    %v1169 = vadd.f32 %v528, %v1168
    %v1170 = vpop.f32.mrb[0].mxu0
    %v1171 = vpop.f32.mrb[0].mxu0
    %1172 = vdwg.mxu0
    %1173 = vmatprep.subr.bf16.mxu0 %v911
    %1174 = vmatpush1.bf16.msra.mxu0 %v910
    %1175 = vmatprep.subr.bf16.mxu0 %v918
    %1176 = vmatpush1.bf16.msra.mxu0 %v917
    %1177 = vmatprep.subr.bf16.mxu0 %v925
    %1178 = vmatpush1.bf16.msra.mxu0 %v924
    %1179 = vmatprep.subr.bf16.mxu0 %v932
    %1180 = vmatpush1.bf16.msra.mxu0 %v931
    %1181 = vmatprep.subr.bf16.mxu0 %v939
    %1182 = vmatpush1.bf16.msra.mxu0 %v938
    %1183 = vmatprep.subr.bf16.mxu0 %v946
    %1184 = vmatpush1.bf16.msra.mxu0 %v945
    %1185 = vmatprep.subr.bf16.mxu0 %v953
    %1186 = vmatpush1.bf16.msra.mxu0 %v952
    %1187 = vmatprep.subr.bf16.mxu0 %v960
    %1188 = vmatpush1.bf16.msra.mxu0 %v959
    %1189 = vmatprep.subr.bf16.mxu0 %v967
    %1190 = vmatpush1.bf16.msra.mxu0 %v966
    %1191 = vmatprep.subr.bf16.mxu0 %v974
    %1192 = vmatpush1.bf16.msra.mxu0 %v973
    %1193 = vmatprep.subr.bf16.mxu0 %v981
    %1194 = vmatpush1.bf16.msra.mxu0 %v980
    %1195 = vmatprep.subr.bf16.mxu0 %v988
    %1196 = vmatpush1.bf16.msra.mxu0 %v987
    %1197 = vmatprep.subr.bf16.mxu0 %v995
    %1198 = vmatpush1.bf16.msra.mxu0 %v994
    %1199 = vmatprep.subr.bf16.mxu0 %v1002
    %1200 = vmatpush1.bf16.msra.mxu0 %v1001
    %1201 = vmatprep.subr.bf16.mxu0 %v1009
    %1202 = vmatpush1.bf16.msra.mxu0 %v1008
    %1203 = vmatprep.subr.bf16.mxu0 %v1016
    %1204 = vmatpush1.bf16.msra.mxu0 %v1015
    %1205 = vmatprep.mubr.bf16.mxu0 %v390
    %1206 = vmatmul.mubr.bf16.gmra.mrb[0].mxu0 %v389
    %v1207 = vpop.f32.mrb[0].mxu0
    %v1208 = vadd.f32 %v532, %v1207
    %v1209 = vpop.f32.mrb[0].mxu0
    %v1210 = vadd.f32 %v536, %v1209
    %v1211 = vpop.f32.mrb[0].mxu0
    %v1212 = vpop.f32.mrb[0].mxu0
    %1213 = vdwg.mxu0
    %1214 = vmatprep.subr.bf16.mxu0 %v913
    %1215 = vmatpush1.bf16.msra.mxu0 %v912
    %1216 = vmatprep.subr.bf16.mxu0 %v920
    %1217 = vmatpush1.bf16.msra.mxu0 %v919
    %1218 = vmatprep.subr.bf16.mxu0 %v927
    %1219 = vmatpush1.bf16.msra.mxu0 %v926
    %1220 = vmatprep.subr.bf16.mxu0 %v934
    %1221 = vmatpush1.bf16.msra.mxu0 %v933
    %1222 = vmatprep.subr.bf16.mxu0 %v941
    %1223 = vmatpush1.bf16.msra.mxu0 %v940
    %1224 = vmatprep.subr.bf16.mxu0 %v948
    %1225 = vmatpush1.bf16.msra.mxu0 %v947
    %1226 = vmatprep.subr.bf16.mxu0 %v955
    %1227 = vmatpush1.bf16.msra.mxu0 %v954
    %1228 = vmatprep.subr.bf16.mxu0 %v962
    %1229 = vmatpush1.bf16.msra.mxu0 %v961
    %1230 = vmatprep.subr.bf16.mxu0 %v969
    %1231 = vmatpush1.bf16.msra.mxu0 %v968
    %1232 = vmatprep.subr.bf16.mxu0 %v976
    %1233 = vmatpush1.bf16.msra.mxu0 %v975
    %1234 = vmatprep.subr.bf16.mxu0 %v983
    %1235 = vmatpush1.bf16.msra.mxu0 %v982
    %1236 = vmatprep.subr.bf16.mxu0 %v990
    %1237 = vmatpush1.bf16.msra.mxu0 %v989
    %1238 = vmatprep.subr.bf16.mxu0 %v997
    %1239 = vmatpush1.bf16.msra.mxu0 %v996
    %1240 = vmatprep.subr.bf16.mxu0 %v1004
    %1241 = vmatpush1.bf16.msra.mxu0 %v1003
    %1242 = vmatprep.subr.bf16.mxu0 %v1011
    %1243 = vmatpush1.bf16.msra.mxu0 %v1010
    %1244 = vmatprep.subr.bf16.mxu0 %v1018
    %1245 = vmatpush1.bf16.msra.mxu0 %v1017
    %1246 = vmatprep.mubr.bf16.mxu0 %v390
    %1247 = vmatmul.mubr.bf16.gmra.mrb[0].mxu0 %v389
    %v1248 = vpop.f32.mrb[0].mxu0
    %v1249 = vadd.f32 %v540, %v1248
    %v1250 = vpop.f32.mrb[0].mxu0
    %v1251 = vadd.f32 %v544, %v1250
    %v1252 = vpop.f32.mrb[0].mxu0
    %v1253 = vpop.f32.mrb[0].mxu0
    %1254 = vdwg.mxu0
    %1255 = vmatprep.subr.bf16.mxu0 0
    %1256 = vmatpush1.bf16.msra.mxu0 %v914
    %1257 = vmatprep.subr.bf16.mxu0 0
    %1258 = vmatpush1.bf16.msra.mxu0 %v921
    %1259 = vmatprep.subr.bf16.mxu0 0
    %1260 = vmatpush1.bf16.msra.mxu0 %v928
    %1261 = vmatprep.subr.bf16.mxu0 0
    %1262 = vmatpush1.bf16.msra.mxu0 %v935
    %1263 = vmatprep.subr.bf16.mxu0 0
    %1264 = vmatpush1.bf16.msra.mxu0 %v942
    %1265 = vmatprep.subr.bf16.mxu0 0
    %1266 = vmatpush1.bf16.msra.mxu0 %v949
    %1267 = vmatprep.subr.bf16.mxu0 0
    %1268 = vmatpush1.bf16.msra.mxu0 %v956
    %1269 = vmatprep.subr.bf16.mxu0 0
    %1270 = vmatpush1.bf16.msra.mxu0 %v963
    %1271 = vmatprep.subr.bf16.mxu0 0
    %1272 = vmatpush1.bf16.msra.mxu0 %v970
    %1273 = vmatprep.subr.bf16.mxu0 0
    %1274 = vmatpush1.bf16.msra.mxu0 %v977
    %1275 = vmatprep.subr.bf16.mxu0 0
    %1276 = vmatpush1.bf16.msra.mxu0 %v984
    %1277 = vmatprep.subr.bf16.mxu0 0
    %1278 = vmatpush1.bf16.msra.mxu0 %v991
    %1279 = vmatprep.subr.bf16.mxu0 0
    %1280 = vmatpush1.bf16.msra.mxu0 %v998
    %1281 = vmatprep.subr.bf16.mxu0 0
    %1282 = vmatpush1.bf16.msra.mxu0 %v1005
    %1283 = vmatprep.subr.bf16.mxu0 0
    %1284 = vmatpush1.bf16.msra.mxu0 %v1012
    %1285 = vmatprep.subr.bf16.mxu0 0
    %1286 = vmatpush1.bf16.msra.mxu0 %v1019
    %1287 = vmatprep.mubr.bf16.mxu0 %v390
    %1288 = vmatmul.mubr.bf16.gmra.mrb[0].mxu0 %v389
    %v1289 = vpop.f32.mrb[0].mxu0
    %v1290 = vadd.f32 %v548, %v1289
    %v1291 = vpop.f32.mrb[0].mxu0
    %v1292 = vpop.f32.mrb[0].mxu0
    %v1293 = vpop.f32.mrb[0].mxu0
    %1294 = vdwg.mxu0
    %v1295 = vtanh.pop %v1167
    %v1296 = vtanh.pop %v1169
    %v1297 = vtanh.pop %v1208
    %v1298 = vtanh.pop %v1210
    %v1299 = vtanh.pop %v1249
    %v1300 = vtanh.pop %v1251
    %v1301 = vtanh.pop %v1290
    %v1302 = vpack.c.bf16 %v1295, %v1295
    %v1303 = vpack.c.bf16 %v1296, %v1296
    %v1304 = vpack.c.bf16 %v1297, %v1297
    %v1305 = vpack.c.bf16 %v1298, %v1298
    %v1306 = vpack.c.bf16 %v1299, %v1299
    %v1307 = vpack.c.bf16 %v1300, %v1300
    %v1308 = vpack.c.bf16 %v1301, %v1301
    %v1316 = vunpack.c.l.b16 %v1302
    %v1317 = vunpack.c.l.b16 %v1303
    %v1318 = vunpack.c.l.b16 %v1304
    %v1319 = vunpack.c.l.b16 %v1305
    %v1320 = vunpack.c.l.b16 %v1306
    %v1321 = vunpack.c.l.b16 %v1307
    %v1322 = vunpack.c.l.b16 %v1308
    %v1323 = vpack.c.b16 %v1317, %v1316
    %v1324 = vpack.c.b16 %v1319, %v1318
    %v1325 = vpack.c.b16 %v1321, %v1320
    %v1326 = vpack.c.b16 %v1322, %v1322
    %1331 = vst [vmem:[#allocation2] sm:$0xff] %v1323
    %1332 = vst [vmem:[#allocation2 + $0x8] sm:$0xff] %v1324
    %1333 = vst [vmem:[#allocation2 + $0x10] sm:$0xff] %v1325
    %vm1334 = vcmask 125952
    %1335 = vst.msk [vmem:[#allocation2 + $0x18] sm:$0xf] %vm1334, %v1326
    // Predicated region
    $region30: #{tpu_custom_call.1} parent=1 // pred_check
      _
    $region31: #{tpu_custom_call.1} parent=1 // pred_check_branch
      %1337 = sbr.rel (0) target = $region33
    $region32: #{tpu_custom_call.1} parent=1 // pred_region
      %s1339 = ssub.s32 448, 448
      %1340 = vsyncadd [#allocation3], %s1339
      %s1342 = sshll.u32 [#allocation2], 4
      %s1343 = int_to_ptr.vmem [resolvable:$true] %s1342
      %1345 = dma.vmem_to_hbm [thread:$0]  %s1343, 448, %s7, [#allocation3]
    $region33: #{tpu_custom_call.1} parent=1 // pred_fallthru
      _
    // Predicated region
    $region34: #{tpu_custom_call.1} parent=1 // pred_check
      _
    $region35: #{tpu_custom_call.1} parent=1 // pred_check_branch
      %1347 = sbr.rel (0) target = $region37
    $region36: #{tpu_custom_call.1} parent=1 // pred_region
      %1348 = dma.done [#allocation3], 448
    $region37: #{tpu_custom_call.1} parent=1 // pred_fallthru
      _
    %1349 = vsyncpa [#allocation3], 1

</llo_original>
